<compile_context>
chip_gen: v7x
topology: tpu7x:2x2x1
jax: 0.10.0
libtpu: 0.0.40
codegen_flags: <defaults>
</compile_context>

<pallas_src>
import functools

import jax
import jax.numpy as jnp
from jax.experimental import pallas as pl
from jax.experimental.pallas import tpu as pltpu


def _round_up(x, m):
    return ((x + m - 1) // m) * m


def embedding_ffn_kernel(x_ref, emb_ref, w1_ref, b1_ref, w2_ref, b2_ref,
                         out_ref, acc_ref, cnt_ref):
    k = pl.program_id(1)

    @pl.when(k == 0)
    def _init():
        acc_ref[...] = jnp.zeros_like(acc_ref)
        cnt_ref[...] = jnp.zeros_like(cnt_ref)

    # --- SparseEmbed1d streamed accumulation over vocab tiles ---
    nz = x_ref[...] != 0                                   # (TILE_B, TILE_V) bool
    mask = nz.astype(jnp.bfloat16)                         # exact in bf16
    acc_ref[...] += jnp.dot(mask, emb_ref[...],            # bf16 x bf16 -> f32 acc
                            preferred_element_type=jnp.float32)
    cnt_ref[...] += jnp.sum(nz.astype(jnp.float32), axis=1, keepdims=True)

    @pl.when(k == pl.num_programs(1) - 1)
    def _finalize():
        # normalize: divide by (count + 1e-6) via EUP approx reciprocal
        inv = pl.reciprocal(cnt_ref[...] + 1e-6, approx=True)      # (TILE_B, 1)
        embed = acc_ref[...] * inv                                  # (TILE_B, F)
        # --- FeedForwardNet (n_layers=1) ---
        h = jnp.dot(embed, w1_ref[...],
                    preferred_element_type=jnp.float32) + b1_ref[...]
        h = jnp.maximum(h, 0.0)                                     # ReLU
        # final head: multiply + lane reduce instead of an N=1 MXU matmul,
        # written lane-dense into a (1, TILE_B) output row.
        out = jnp.sum(h * w2_ref[...], axis=-1) + b2_ref[0, 0]      # (TILE_B,)
        out_ref[...] = out[None, :].astype(out_ref.dtype)


def embedding_ffn(x, emb, w1, b1, w2, b2, *, tile_b=256, tile_v=512):
    """x: (B, V) multi-hot; emb: (V, F); w1: (F, U); b1: (1, U); w2: (1, U); b2: (1, 1)."""
    B, V = x.shape
    F = emb.shape[1]
    U = w1.shape[1]

    TILE_B = min(tile_b, _round_up(B, 128))
    TILE_V = min(tile_v, _round_up(V, 128))
    B_pad = _round_up(B, TILE_B)
    V_pad = _round_up(V, TILE_V)
    num_b = B_pad // TILE_B
    num_v = V_pad // TILE_V

    # Zero-padding: padded x columns/rows contribute nothing (mask == 0); padded
    # batch rows are sliced off below. Embedding table stored bf16 (halves the
    # dominant HBM stream; accumulation stays f32).
    x_p = jnp.pad(x, ((0, B_pad - B), (0, V_pad - V)))
    emb_p = jnp.pad(emb.astype(jnp.bfloat16), ((0, V_pad - V), (0, 0)))

    grid_spec = pltpu.PrefetchScalarGridSpec(
        num_scalar_prefetch=0,
        grid=(num_b, num_v),
        in_specs=[
            pl.BlockSpec((TILE_B, TILE_V), lambda i, k: (i, k)),   # x
            pl.BlockSpec((TILE_V, F), lambda i, k: (k, 0)),        # emb (streamed)
            pl.BlockSpec((F, U), lambda i, k: (0, 0)),             # w1 (resident)
            pl.BlockSpec((1, U), lambda i, k: (0, 0)),             # b1
            pl.BlockSpec((1, U), lambda i, k: (0, 0)),             # w2 (row vector)
            pl.BlockSpec(memory_space=pltpu.MemorySpace.SMEM),     # b2 scalar
        ],
        out_specs=pl.BlockSpec((1, TILE_B), lambda i, k: (0, i)),  # lane-dense
        scratch_shapes=[
            pltpu.VMEM((TILE_B, F), jnp.float32),   # embed-sum accumulator
            pltpu.VMEM((TILE_B, 1), jnp.float32),   # nonzero-count accumulator
        ],
    )

    out_padded = pl.pallas_call(
        embedding_ffn_kernel,
        out_shape=jax.ShapeDtypeStruct((1, B_pad), jnp.float32),
        grid_spec=grid_spec,
        compiler_params=pltpu.CompilerParams(
            dimension_semantics=("parallel", "arbitrary"),
            vmem_limit_bytes=32 * 1024 * 1024,
        ),
    )(x_p, emb_p, w1, b1, w2, b2)

    return out_padded[0, :B].reshape(B, 1)


def reference(x, emb, w1, b1, w2, b2):
    mask = (x != 0).astype(jnp.float32)
    embed = (mask @ emb) / (mask.sum(axis=1, keepdims=True) + 1e-6)
    h = jnp.maximum(embed @ w1 + b1, 0.0)
    return jnp.sum(h * w2, axis=-1, keepdims=True) + b2


if __name__ == "__main__":
    # Small shapes consistent with the module's forward (B x input_size multi-hot).
    B, input_size, feat_size, unit_size = 8, 256, 128, 128

    key = jax.random.PRNGKey(0)
    k_x, k_e, k_w1, k_b1, k_w2, k_b2 = jax.random.split(key, 6)

    # Sparse multi-hot input: only the nonzero pattern matters.
    x = jax.random.bernoulli(k_x, p=0.1, shape=(B, input_size)).astype(jnp.float32)

    # Deterministic synthetic parameters (shapes match nn.Embedding / nn.Linear).
    emb = jax.random.normal(k_e, (input_size, feat_size), jnp.float32) * 0.05
    w1 = jax.random.normal(k_w1, (feat_size, unit_size), jnp.float32) * 0.05   # Linear1.weight.T
    b1 = jax.random.normal(k_b1, (1, unit_size), jnp.float32) * 0.05
    w2 = jax.random.normal(k_w2, (1, unit_size), jnp.float32) * 0.05           # Linear2.weight
    b2 = jax.random.normal(k_b2, (1, 1), jnp.float32) * 0.05

    out = embedding_ffn(x, emb, w1, b1, w2, b2)
    out = jax.block_until_ready(out)

    ref = reference(x, emb, w1, b1, w2, b2)
    assert out.shape == (B, 1), out.shape
    # Tolerance covers bf16 embedding-table storage + approx reciprocal.
    assert jnp.allclose(out, ref, atol=1e-3, rtol=1e-3), (out, ref)

    print("KERNEL_OK")
</pallas_src>

<mosaic_0001>
module attributes {stable_mosaic.version = 11 : i64} {
  func.func @embedding_ffn_kernel(%arg0: i32, %arg1: i32, %arg2: memref<128x256xf32, #tpu.memory_space<vmem>>, %arg3: memref<256x128xbf16, #tpu.memory_space<vmem>>, %arg4: memref<128x128xf32, #tpu.memory_space<vmem>>, %arg5: memref<1x128xf32, #tpu.memory_space<vmem>>, %arg6: memref<1x128xf32, #tpu.memory_space<vmem>>, %arg7: memref<1x1xf32, #tpu.memory_space<smem>>, %arg8: memref<1x128xf32, #tpu.memory_space<vmem>>, %arg9: memref<128x128xf32, #tpu.memory_space<vmem>>, %arg10: memref<128x1xf32, #tpu.memory_space<vmem>>) attributes {dimension_semantics = [#tpu.dimension_semantics<parallel>, #tpu.dimension_semantics<arbitrary>], iteration_bounds = array<i64: 1, 1>, scalar_prefetch = 0 : i64, scratch_operands = 2 : i64, tpu.core_type = #tpu.core_type<tc>, window_params = [{transform_indices = @transform_0, window_bounds = array<i64: 128, 256>}, {transform_indices = @transform_1, window_bounds = array<i64: 256, 128>}, {pipeline_mode = #tpu.pipeline_mode<synchronous>, transform_indices = @transform_2, window_bounds = array<i64: 128, 128>}, {pipeline_mode = #tpu.pipeline_mode<synchronous>, transform_indices = @transform_3, window_bounds = array<i64: 1, 128>}, {pipeline_mode = #tpu.pipeline_mode<synchronous>, transform_indices = @transform_4, window_bounds = array<i64: 1, 128>}, {transform_indices = @transform_5, window_bounds = array<i64: 1, 1>}, {transform_indices = @transform_6, window_bounds = array<i64: 1, 128>}]} {
    %c0_i32 = arith.constant 0 : i32
    %0 = arith.cmpi eq, %arg1, %c0_i32 : i32
    %1 = arith.extui %0 : i1 to i32
    %c0_i32_0 = arith.constant 0 : i32
    %2 = arith.cmpi ne, %1, %c0_i32_0 : i32
    scf.if %2 {
      %cst_16 = arith.constant 0.000000e+00 : f32
      %24 = vector.broadcast %cst_16 : f32 to vector<128x128xf32>
      %c0_17 = arith.constant 0 : index
      %c0_18 = arith.constant 0 : index
      %25 = vector.load %arg9[%c0_17, %c0_18] : memref<128x128xf32, #tpu.memory_space<vmem>>, vector<128x128xf32>
      tpu.vector_store %arg9[%c0_17, %c0_18], %24 {strides = array<i32>} : memref<128x128xf32, #tpu.memory_space<vmem>>, vector<128x128xf32>,
      %cst_19 = arith.constant 0.000000e+00 : f32
      %26 = vector.broadcast %cst_19 : f32 to vector<128x1xf32>
      %c0_20 = arith.constant 0 : index
      %c0_21 = arith.constant 0 : index
      %27 = vector.load %arg10[%c0_20, %c0_21] : memref<128x1xf32, #tpu.memory_space<vmem>>, vector<128x1xf32>
      tpu.vector_store %arg10[%c0_20, %c0_21], %26 {strides = array<i32>} : memref<128x1xf32, #tpu.memory_space<vmem>>, vector<128x1xf32>,
    } else {
    }
    %c0 = arith.constant 0 : index
    %c0_1 = arith.constant 0 : index
    %3 = vector.load %arg2[%c0, %c0_1] : memref<128x256xf32, #tpu.memory_space<vmem>>, vector<128x256xf32>
    %cst = arith.constant 0.000000e+00 : f32
    %4 = vector.broadcast %cst : f32 to vector<128x256xf32>
    %5 = arith.cmpf one, %3, %4 : vector<128x256xf32>
    %6 = arith.extui %5 : vector<128x256xi1> to vector<128x256xi32>
    %7 = arith.sitofp %6 : vector<128x256xi32> to vector<128x256xf32>
    %8 = arith.truncf %7 : vector<128x256xf32> to vector<128x256xbf16>
    %c0_2 = arith.constant 0 : index
    %c0_3 = arith.constant 0 : index
    %9 = vector.load %arg9[%c0_2, %c0_3] : memref<128x128xf32, #tpu.memory_space<vmem>>, vector<128x128xf32>
    %c0_4 = arith.constant 0 : index
    %c0_5 = arith.constant 0 : index
    %10 = vector.load %arg3[%c0_4, %c0_5] : memref<256x128xbf16, #tpu.memory_space<vmem>>, vector<256x128xbf16>
    %cst_6 = arith.constant dense<0.000000e+00> : vector<128x128xf32>
    %11 = tpu.matmul %8, %10, %cst_6 {dimension_numbers = #tpu.dot_dimension_numbers<[1], [0], [0], [1], [0, 0, 1, 1], [], []>} : vector<128x256xbf16>, vector<256x128xbf16>, vector<128x128xf32> -> vector<128x128xf32>
    %12 = arith.addf %9, %11 : vector<128x128xf32>
    %c0_7 = arith.constant 0 : index
    %c0_8 = arith.constant 0 : index
    %13 = vector.load %arg9[%c0_7, %c0_8] : memref<128x128xf32, #tpu.memory_space<vmem>>, vector<128x128xf32>
    tpu.vector_store %arg9[%c0_7, %c0_8], %12 {strides = array<i32>} : memref<128x128xf32, #tpu.memory_space<vmem>>, vector<128x128xf32>,
    %c0_9 = arith.constant 0 : index
    %c0_10 = arith.constant 0 : index
    %14 = vector.load %arg10[%c0_9, %c0_10] : memref<128x1xf32, #tpu.memory_space<vmem>>, vector<128x1xf32>
    %15 = arith.extui %5 : vector<128x256xi1> to vector<128x256xi32>
    %16 = arith.sitofp %15 : vector<128x256xi32> to vector<128x256xf32>
    %cst_11 = arith.constant dense<0.000000e+00> : vector<128xf32>
    %17 = vector.multi_reduction <add>, %16, %cst_11 [1] : vector<128x256xf32> to vector<128xf32>
    %18 = vector.shape_cast %17 : vector<128xf32> to vector<128x1xf32>
    %19 = arith.addf %14, %18 : vector<128x1xf32>
    %c0_12 = arith.constant 0 : index
    %c0_13 = arith.constant 0 : index
    %20 = vector.load %arg10[%c0_12, %c0_13] : memref<128x1xf32, #tpu.memory_space<vmem>>, vector<128x1xf32>
    tpu.vector_store %arg10[%c0_12, %c0_13], %19 {strides = array<i32>} : memref<128x1xf32, #tpu.memory_space<vmem>>, vector<128x1xf32>,
    %c0_i32_14 = arith.constant 0 : i32
    %21 = arith.cmpi eq, %arg1, %c0_i32_14 : i32
    %22 = arith.extui %21 : i1 to i32
    %c0_i32_15 = arith.constant 0 : i32
    %23 = arith.cmpi ne, %22, %c0_i32_15 : i32
    scf.if %23 {
      %c0_16 = arith.constant 0 : index
      %c0_17 = arith.constant 0 : index
      %24 = vector.load %arg10[%c0_16, %c0_17] : memref<128x1xf32, #tpu.memory_space<vmem>>, vector<128x1xf32>
      %cst_18 = arith.constant 9.99999997E-7 : f32
      %25 = vector.broadcast %cst_18 : f32 to vector<128x1xf32>
      %26 = arith.addf %24, %25 : vector<128x1xf32>
      %27 = tpu.reciprocal %26 {approx = true} : vector<128x1xf32> -> vector<128x1xf32>
      %c0_19 = arith.constant 0 : index
      %c0_20 = arith.constant 0 : index
      %28 = vector.load %arg9[%c0_19, %c0_20] : memref<128x128xf32, #tpu.memory_space<vmem>>, vector<128x128xf32>
      %29 = vector.broadcast %27 : vector<128x1xf32> to vector<128x128xf32>
      %30 = arith.mulf %28, %29 : vector<128x128xf32>
      %c0_21 = arith.constant 0 : index
      %c0_22 = arith.constant 0 : index
      %31 = vector.load %arg4[%c0_21, %c0_22] : memref<128x128xf32, #tpu.memory_space<vmem>>, vector<128x128xf32>
      %cst_23 = arith.constant dense<0.000000e+00> : vector<128x128xf32>
      %32 = tpu.matmul %30, %31, %cst_23 {dimension_numbers = #tpu.dot_dimension_numbers<[1], [0], [0], [1], [0, 0, 1, 1], [], []>} : vector<128x128xf32>, vector<128x128xf32>, vector<128x128xf32> -> vector<128x128xf32>
      %c0_24 = arith.constant 0 : index
      %c0_25 = arith.constant 0 : index
      %33 = vector.load %arg5[%c0_24, %c0_25] : memref<1x128xf32, #tpu.memory_space<vmem>>, vector<1x128xf32>
      %34 = vector.broadcast %33 : vector<1x128xf32> to vector<128x128xf32>
      %35 = arith.addf %32, %34 : vector<128x128xf32>
      %cst_26 = arith.constant 0.000000e+00 : f32
      %36 = vector.broadcast %cst_26 : f32 to vector<128x128xf32>
      %37 = arith.maximumf %35, %36 : vector<128x128xf32>
      %c0_27 = arith.constant 0 : index
      %c0_28 = arith.constant 0 : index
      %38 = vector.load %arg6[%c0_27, %c0_28] : memref<1x128xf32, #tpu.memory_space<vmem>>, vector<1x128xf32>
      %39 = vector.broadcast %38 : vector<1x128xf32> to vector<128x128xf32>
      %40 = arith.mulf %37, %39 : vector<128x128xf32>
      %cst_29 = arith.constant dense<0.000000e+00> : vector<128xf32>
      %41 = vector.multi_reduction <add>, %40, %cst_29 [1] : vector<128x128xf32> to vector<128xf32>
      %c0_30 = arith.constant 0 : index
      %c0_31 = arith.constant 0 : index
      %42 = memref.load %arg7[%c0_30, %c0_31] : memref<1x1xf32, #tpu.memory_space<smem>>
      %43 = vector.broadcast %42 : f32 to vector<128xf32>
      %44 = arith.addf %41, %43 : vector<128xf32>
      %45 = vector.shape_cast %44 : vector<128xf32> to vector<1x128xf32>
      %c0_32 = arith.constant 0 : index
      %c0_33 = arith.constant 0 : index
      %46 = vector.load %arg8[%c0_32, %c0_33] : memref<1x128xf32, #tpu.memory_space<vmem>>, vector<1x128xf32>
      tpu.vector_store %arg8[%c0_32, %c0_33], %45 {strides = array<i32>} : memref<1x128xf32, #tpu.memory_space<vmem>>, vector<1x128xf32>,
    } else {
    }
    return
  }
  func.func @transform_0(%arg0: i32, %arg1: i32) -> (i32, i32) {
    %c0_i32 = arith.constant 0 : i32
    return %arg0, %arg1 : i32, i32
  }
  func.func @transform_1(%arg0: i32, %arg1: i32) -> (i32, i32) {
    %c0_i32 = arith.constant 0 : i32
    %c0_i32_0 = arith.constant 0 : i32
    return %arg1, %c0_i32 : i32, i32
  }
  func.func @transform_2(%arg0: i32, %arg1: i32) -> (i32, i32) {
    %c0_i32 = arith.constant 0 : i32
    %c0_i32_0 = arith.constant 0 : i32
    %c0_i32_1 = arith.constant 0 : i32
    return %c0_i32, %c0_i32_0 : i32, i32
  }
  func.func @transform_3(%arg0: i32, %arg1: i32) -> (i32, i32) {
    %c0_i32 = arith.constant 0 : i32
    %c0_i32_0 = arith.constant 0 : i32
    %c0_i32_1 = arith.constant 0 : i32
    return %c0_i32, %c0_i32_0 : i32, i32
  }
  func.func @transform_4(%arg0: i32, %arg1: i32) -> (i32, i32) {
    %c0_i32 = arith.constant 0 : i32
    %c0_i32_0 = arith.constant 0 : i32
    %c0_i32_1 = arith.constant 0 : i32
    return %c0_i32, %c0_i32_0 : i32, i32
  }
  func.func @transform_5(%arg0: i32, %arg1: i32) -> (i32, i32) {
    %c0_i32 = arith.constant 0 : i32
    %c0_i32_0 = arith.constant 0 : i32
    %c0_i32_1 = arith.constant 0 : i32
    return %c0_i32, %c0_i32_0 : i32, i32
  }
  func.func @transform_6(%arg0: i32, %arg1: i32) -> (i32, i32) {
    %c0_i32 = arith.constant 0 : i32
    %c0_i32_0 = arith.constant 0 : i32
    return %c0_i32, %arg0 : i32, i32
  }
}

</mosaic_0001>

<llo_original>
// kernel: tpu_custom_call.1
$region0: #{tpu_custom_call.1}
  #allocation0 [shape = 'u32[]', space=smem, size = 0x4, offset = 0x4, fixed_abs, tag = 'smem constant byte address 0x4 - core index']
  #allocation1 [shape = 'u32[144,128]{1,0:T(1,128)}', space=vmem, size = 0x12000, scoped, tag = 'internal scratch']
  #allocation2 [shape = 'f32[128,128]{1,0:T(8,128)}', space=vmem, size = 0x10000, scoped, tag = 'scratch operand']
  #allocation3 [shape = 'f32[128,1]{1,0:T(8,128)}', space=vmem, size = 0x10000, scoped, tag = 'scratch operand']
  #allocation4 [shape = 'f32[1,1]{1,0:T(1,128)S(6)}', space=smem, size = 0x200, scoped, tag = 'scoped memory for tpu_custom_call.1']
  %s0 = inlined_call_operand.hbm [shape: f32[128,256], index: 0, kind: input, shape index: {}]
  %s1 = inlined_call_operand.hbm [shape: bf16[256,128], index: 1, kind: input, shape index: {}]
  %s2 = inlined_call_operand.hbm [shape: f32[128,128], index: 2, kind: input, shape index: {}]
  %s3 = inlined_call_operand.vmem [shape: f32[1,128], index: 3, kind: input, shape index: {}]
  %s4 = inlined_call_operand.vmem [shape: f32[1,128], index: 4, kind: input, shape index: {}]
  %s5 = inlined_call_operand.<no memory space> [shape: f32[1,1], index: 5, kind: input, shape index: {}]
  %s6 = inlined_call_operand.hbm [shape: f32[1,128], index: 6, kind: output, shape index: {}]
  %s7 = sld [smem:[#allocation0]]
  $region54: #{tpu_custom_call.1} parent=0
    _
  %s9 = ssub.s32 1, %s7
  %s10 = scalar_select 0, %s9, %s7
  %11 = sst [smem:[#allocation4]] %s5
  $region1: #{tpu_custom_call.1} parent=0
    #allocation5 [shape = 'u8[131072]{0}', space=vmem, size = 0x20000, scoped, tag = 'input window, operand 0, single buffered']
    #allocation6 [shape = 's32[1]{0}', space=sflag, size = 0x4, scoped, tag = 'scoped memory for tpu_custom_call.1']
    #allocation7 [shape = 's32[1]{0}', space=sflag, size = 0x4, scoped, tag = 'scoped memory for tpu_custom_call.1']
    #allocation8 [shape = 'u8[65536]{0}', space=vmem, size = 0x10000, scoped, tag = 'input window, operand 1, single buffered']
    #allocation9 [shape = 's32[1]{0}', space=sflag, size = 0x4, scoped, tag = 'scoped memory for tpu_custom_call.1']
    #allocation10 [shape = 'u8[65536]{0}', space=vmem, size = 0x10000, scoped, tag = 'input window, operand 2, single buffered']
    #allocation11 [shape = 'u8[512]{0}', space=vmem, size = 0x400, scoped, tag = 'output window, operand 0, single buffered']
    %12 = vsyncpa [#allocation6], 0
    %13 = vsyncpa [#allocation9], 0
    %14 = vsyncpa [#allocation7], 0
    // Predicated region
    $region2: #{tpu_custom_call.1} parent=1 // pred_check
      _
    $region3: #{tpu_custom_call.1} parent=1 // pred_check_branch
      %16 = sbr.rel (0) target = $region5
    $region4: #{tpu_custom_call.1} parent=1 // pred_region
      %s18 = ssub.s32 4096, 4096
      %19 = vsyncadd [#allocation6], %s18
      %s20 = sshll.u32 [#allocation5], 4
      %s21 = int_to_ptr.vmem [resolvable:$true] %s20
      %26 = dma.hbm_to_vmem [thread:$0]  %s0, 4096, %s21, [#allocation6], 256, 256, 16
    $region5: #{tpu_custom_call.1} parent=1 // pred_fallthru
      _
    // Predicated region
    $region6: #{tpu_custom_call.1} parent=1 // pred_check
      _
    $region7: #{tpu_custom_call.1} parent=1 // pred_check_branch
      %28 = sbr.rel (0) target = $region9
    $region8: #{tpu_custom_call.1} parent=1 // pred_region
      %s30 = ssub.s32 2048, 2048
      %31 = vsyncadd [#allocation9], %s30
      %s32 = sshll.u32 [#allocation8], 4
      %s33 = int_to_ptr.vmem [resolvable:$true] %s32
      %38 = dma.hbm_to_vmem [thread:$0]  %s1, 2048, %s33, [#allocation9], 64, 64, 4
    $region9: #{tpu_custom_call.1} parent=1 // pred_fallthru
      _
    // Predicated region
    $region10: #{tpu_custom_call.1} parent=1 // pred_check
      _
    $region11: #{tpu_custom_call.1} parent=1 // pred_check_branch
      %40 = sbr.rel (0) target = $region13
    $region12: #{tpu_custom_call.1} parent=1 // pred_region
      %s42 = ssub.s32 2048, 2048
      %43 = vsyncadd [#allocation9], %s42
      %s44 = sshll.u32 [#allocation10], 4
      %s45 = int_to_ptr.vmem [resolvable:$true] %s44
      %50 = dma.hbm_to_vmem [thread:$0]  %s2, 2048, %s45, [#allocation9], 128, 128, 8
    $region13: #{tpu_custom_call.1} parent=1 // pred_fallthru
      _
    // Predicated region
    $region14: #{tpu_custom_call.1} parent=1 // pred_check
      _
    $region15: #{tpu_custom_call.1} parent=1 // pred_check_branch
      %52 = sbr.rel (0) target = $region17
    $region16: #{tpu_custom_call.1} parent=1 // pred_region
      _
    $region17: #{tpu_custom_call.1} parent=1 // pred_fallthru
      _
    // Predicated region
    $region18: #{tpu_custom_call.1} parent=1 // pred_check
      _
    $region19: #{tpu_custom_call.1} parent=1 // pred_check_branch
      %54 = sbr.rel (0) target = $region21
    $region20: #{tpu_custom_call.1} parent=1 // pred_region
      _
    $region21: #{tpu_custom_call.1} parent=1 // pred_fallthru
      _
    // Predicated region
    $region22: #{tpu_custom_call.1} parent=1 // pred_check
      _
    $region23: #{tpu_custom_call.1} parent=1 // pred_check_branch
      %56 = sbr.rel (0) target = $region25
    $region24: #{tpu_custom_call.1} parent=1 // pred_region
      _
    $region25: #{tpu_custom_call.1} parent=1 // pred_fallthru
      _
    // Predicated region
    $region26: #{tpu_custom_call.1} parent=1 // pred_check
      _
    $region27: #{tpu_custom_call.1} parent=1 // pred_check_branch
      %58 = sbr.rel (0) target = $region29
    $region28: #{tpu_custom_call.1} parent=1 // pred_region
      %59 = dma.done [#allocation6], 4096
    $region29: #{tpu_custom_call.1} parent=1 // pred_fallthru
      _
    // Predicated region
    $region30: #{tpu_custom_call.1} parent=1 // pred_check
      _
    $region31: #{tpu_custom_call.1} parent=1 // pred_check_branch
      %61 = sbr.rel (0) target = $region33
    $region32: #{tpu_custom_call.1} parent=1 // pred_region
      %62 = dma.done [#allocation9], 2048
    $region33: #{tpu_custom_call.1} parent=1 // pred_fallthru
      _
    // Predicated region
    $region34: #{tpu_custom_call.1} parent=1 // pred_check
      _
    $region35: #{tpu_custom_call.1} parent=1 // pred_check_branch
      %64 = sbr.rel (0) target = $region37
    $region36: #{tpu_custom_call.1} parent=1 // pred_region
      %65 = dma.done [#allocation9], 2048
    $region37: #{tpu_custom_call.1} parent=1 // pred_fallthru
      _
    %p67 = scmp.eq.s32.totalorder 0, 0
    // Predicated region
    $region38: #{tpu_custom_call.1} parent=1 // pred_check
      %p68 = pneg %p67
    $region39: #{tpu_custom_call.1} parent=1 // pred_check_branch
      %70 = sbr.rel (%p68) target = $region41
    $region40: #{tpu_custom_call.1} parent=1 // pred_region
      %71 = vst [vmem:[#allocation2] sm:$0xff] 0.0
      %72 = vst [vmem:[#allocation2 + $0x8] sm:$0xff] 0.0
      %73 = vst [vmem:[#allocation2 + $0x10] sm:$0xff] 0.0
      %74 = vst [vmem:[#allocation2 + $0x18] sm:$0xff] 0.0
      %75 = vst [vmem:[#allocation2 + $0x20] sm:$0xff] 0.0
      %76 = vst [vmem:[#allocation2 + $0x28] sm:$0xff] 0.0
      %77 = vst [vmem:[#allocation2 + $0x30] sm:$0xff] 0.0
      %78 = vst [vmem:[#allocation2 + $0x38] sm:$0xff] 0.0
      %79 = vst [vmem:[#allocation2 + $0x40] sm:$0xff] 0.0
      %80 = vst [vmem:[#allocation2 + $0x48] sm:$0xff] 0.0
      %81 = vst [vmem:[#allocation2 + $0x50] sm:$0xff] 0.0
      %82 = vst [vmem:[#allocation2 + $0x58] sm:$0xff] 0.0
      %83 = vst [vmem:[#allocation2 + $0x60] sm:$0xff] 0.0
      %84 = vst [vmem:[#allocation2 + $0x68] sm:$0xff] 0.0
      %85 = vst [vmem:[#allocation2 + $0x70] sm:$0xff] 0.0
      %86 = vst [vmem:[#allocation2 + $0x78] sm:$0xff] 0.0
      %vm87 = vcmask 7168
      %88 = vst.msk [vmem:[#allocation3] sm:$0xff] %vm87, 0.0
      %89 = vst.msk [vmem:[#allocation3 + $0x8] sm:$0xff] %vm87, 0.0
      %90 = vst.msk [vmem:[#allocation3 + $0x10] sm:$0xff] %vm87, 0.0
      %91 = vst.msk [vmem:[#allocation3 + $0x18] sm:$0xff] %vm87, 0.0
      %92 = vst.msk [vmem:[#allocation3 + $0x20] sm:$0xff] %vm87, 0.0
      %93 = vst.msk [vmem:[#allocation3 + $0x28] sm:$0xff] %vm87, 0.0
      %94 = vst.msk [vmem:[#allocation3 + $0x30] sm:$0xff] %vm87, 0.0
      %95 = vst.msk [vmem:[#allocation3 + $0x38] sm:$0xff] %vm87, 0.0
      %96 = vst.msk [vmem:[#allocation3 + $0x40] sm:$0xff] %vm87, 0.0
      %97 = vst.msk [vmem:[#allocation3 + $0x48] sm:$0xff] %vm87, 0.0
      %98 = vst.msk [vmem:[#allocation3 + $0x50] sm:$0xff] %vm87, 0.0
      %99 = vst.msk [vmem:[#allocation3 + $0x58] sm:$0xff] %vm87, 0.0
      %100 = vst.msk [vmem:[#allocation3 + $0x60] sm:$0xff] %vm87, 0.0
      %101 = vst.msk [vmem:[#allocation3 + $0x68] sm:$0xff] %vm87, 0.0
      %102 = vst.msk [vmem:[#allocation3 + $0x70] sm:$0xff] %vm87, 0.0
      %103 = vst.msk [vmem:[#allocation3 + $0x78] sm:$0xff] %vm87, 0.0
    $region41: #{tpu_custom_call.1} parent=1 // pred_fallthru
      _
    %v104 = vld [vmem:[#allocation5] sm:$0xff]
    %v105 = vld [vmem:[#allocation5 + $0x8] sm:$0xff]
    %v106 = vld [vmem:[#allocation5 + $0x10] sm:$0xff]
    %v107 = vld [vmem:[#allocation5 + $0x18] sm:$0xff]
    %v108 = vld [vmem:[#allocation5 + $0x20] sm:$0xff]
    %v109 = vld [vmem:[#allocation5 + $0x28] sm:$0xff]
    %v110 = vld [vmem:[#allocation5 + $0x30] sm:$0xff]
    %v111 = vld [vmem:[#allocation5 + $0x38] sm:$0xff]
    %v112 = vld [vmem:[#allocation5 + $0x40] sm:$0xff]
    %v113 = vld [vmem:[#allocation5 + $0x48] sm:$0xff]
    %v114 = vld [vmem:[#allocation5 + $0x50] sm:$0xff]
    %v115 = vld [vmem:[#allocation5 + $0x58] sm:$0xff]
    %v116 = vld [vmem:[#allocation5 + $0x60] sm:$0xff]
    %v117 = vld [vmem:[#allocation5 + $0x68] sm:$0xff]
    %v118 = vld [vmem:[#allocation5 + $0x70] sm:$0xff]
    %v119 = vld [vmem:[#allocation5 + $0x78] sm:$0xff]
    %v120 = vld [vmem:[#allocation5 + $0x80] sm:$0xff]
    %v121 = vld [vmem:[#allocation5 + $0x88] sm:$0xff]
    %v122 = vld [vmem:[#allocation5 + $0x90] sm:$0xff]
    %v123 = vld [vmem:[#allocation5 + $0x98] sm:$0xff]
    %v124 = vld [vmem:[#allocation5 + $0xa0] sm:$0xff]
    %v125 = vld [vmem:[#allocation5 + $0xa8] sm:$0xff]
    %v126 = vld [vmem:[#allocation5 + $0xb0] sm:$0xff]
    %v127 = vld [vmem:[#allocation5 + $0xb8] sm:$0xff]
    %v128 = vld [vmem:[#allocation5 + $0xc0] sm:$0xff]
    %v129 = vld [vmem:[#allocation5 + $0xc8] sm:$0xff]
    %v130 = vld [vmem:[#allocation5 + $0xd0] sm:$0xff]
    %v131 = vld [vmem:[#allocation5 + $0xd8] sm:$0xff]
    %v132 = vld [vmem:[#allocation5 + $0xe0] sm:$0xff]
    %v133 = vld [vmem:[#allocation5 + $0xe8] sm:$0xff]
    %v134 = vld [vmem:[#allocation5 + $0xf0] sm:$0xff]
    %v135 = vld [vmem:[#allocation5 + $0xf8] sm:$0xff]
    %vm136 = vcmp.ne.f32.partialorder %v104, 0.0
    %vm137 = vcmp.ne.f32.partialorder %v105, 0.0
    %vm138 = vcmp.ne.f32.partialorder %v106, 0.0
    %vm139 = vcmp.ne.f32.partialorder %v107, 0.0
    %vm140 = vcmp.ne.f32.partialorder %v108, 0.0
    %vm141 = vcmp.ne.f32.partialorder %v109, 0.0
    %vm142 = vcmp.ne.f32.partialorder %v110, 0.0
    %vm143 = vcmp.ne.f32.partialorder %v111, 0.0
    %vm144 = vcmp.ne.f32.partialorder %v112, 0.0
    %vm145 = vcmp.ne.f32.partialorder %v113, 0.0
    %vm146 = vcmp.ne.f32.partialorder %v114, 0.0
    %vm147 = vcmp.ne.f32.partialorder %v115, 0.0
    %vm148 = vcmp.ne.f32.partialorder %v116, 0.0
    %vm149 = vcmp.ne.f32.partialorder %v117, 0.0
    %vm150 = vcmp.ne.f32.partialorder %v118, 0.0
    %vm151 = vcmp.ne.f32.partialorder %v119, 0.0
    %vm152 = vcmp.ne.f32.partialorder %v120, 0.0
    %vm153 = vcmp.ne.f32.partialorder %v121, 0.0
    %vm154 = vcmp.ne.f32.partialorder %v122, 0.0
    %vm155 = vcmp.ne.f32.partialorder %v123, 0.0
    %vm156 = vcmp.ne.f32.partialorder %v124, 0.0
    %vm157 = vcmp.ne.f32.partialorder %v125, 0.0
    %vm158 = vcmp.ne.f32.partialorder %v126, 0.0
    %vm159 = vcmp.ne.f32.partialorder %v127, 0.0
    %vm160 = vcmp.ne.f32.partialorder %v128, 0.0
    %vm161 = vcmp.ne.f32.partialorder %v129, 0.0
    %vm162 = vcmp.ne.f32.partialorder %v130, 0.0
    %vm163 = vcmp.ne.f32.partialorder %v131, 0.0
    %vm164 = vcmp.ne.f32.partialorder %v132, 0.0
    %vm165 = vcmp.ne.f32.partialorder %v133, 0.0
    %vm166 = vcmp.ne.f32.partialorder %v134, 0.0
    %vm167 = vcmp.ne.f32.partialorder %v135, 0.0
    %v168 = vsel %vm136, 1, 0
    %v169 = vsel %vm137, 1, 0
    %v170 = vsel %vm138, 1, 0
    %v171 = vsel %vm139, 1, 0
    %v172 = vsel %vm140, 1, 0
    %v173 = vsel %vm141, 1, 0
    %v174 = vsel %vm142, 1, 0
    %v175 = vsel %vm143, 1, 0
    %v176 = vsel %vm144, 1, 0
    %v177 = vsel %vm145, 1, 0
    %v178 = vsel %vm146, 1, 0
    %v179 = vsel %vm147, 1, 0
    %v180 = vsel %vm148, 1, 0
    %v181 = vsel %vm149, 1, 0
    %v182 = vsel %vm150, 1, 0
    %v183 = vsel %vm151, 1, 0
    %v184 = vsel %vm152, 1, 0
    %v185 = vsel %vm153, 1, 0
    %v186 = vsel %vm154, 1, 0
    %v187 = vsel %vm155, 1, 0
    %v188 = vsel %vm156, 1, 0
    %v189 = vsel %vm157, 1, 0
    %v190 = vsel %vm158, 1, 0
    %v191 = vsel %vm159, 1, 0
    %v192 = vsel %vm160, 1, 0
    %v193 = vsel %vm161, 1, 0
    %v194 = vsel %vm162, 1, 0
    %v195 = vsel %vm163, 1, 0
    %v196 = vsel %vm164, 1, 0
    %v197 = vsel %vm165, 1, 0
    %v198 = vsel %vm166, 1, 0
    %v199 = vsel %vm167, 1, 0
    %v200 = vcvt.s32.f32 %v168
    %v201 = vcvt.s32.f32 %v169
    %v202 = vcvt.s32.f32 %v170
    %v203 = vcvt.s32.f32 %v171
    %v204 = vcvt.s32.f32 %v172
    %v205 = vcvt.s32.f32 %v173
    %v206 = vcvt.s32.f32 %v174
    %v207 = vcvt.s32.f32 %v175
    %v208 = vcvt.s32.f32 %v176
    %v209 = vcvt.s32.f32 %v177
    %v210 = vcvt.s32.f32 %v178
    %v211 = vcvt.s32.f32 %v179
    %v212 = vcvt.s32.f32 %v180
    %v213 = vcvt.s32.f32 %v181
    %v214 = vcvt.s32.f32 %v182
    %v215 = vcvt.s32.f32 %v183
    %v216 = vcvt.s32.f32 %v184
    %v217 = vcvt.s32.f32 %v185
    %v218 = vcvt.s32.f32 %v186
    %v219 = vcvt.s32.f32 %v187
    %v220 = vcvt.s32.f32 %v188
    %v221 = vcvt.s32.f32 %v189
    %v222 = vcvt.s32.f32 %v190
    %v223 = vcvt.s32.f32 %v191
    %v224 = vcvt.s32.f32 %v192
    %v225 = vcvt.s32.f32 %v193
    %v226 = vcvt.s32.f32 %v194
    %v227 = vcvt.s32.f32 %v195
    %v228 = vcvt.s32.f32 %v196
    %v229 = vcvt.s32.f32 %v197
    %v230 = vcvt.s32.f32 %v198
    %v231 = vcvt.s32.f32 %v199
    %v232 = vpack.c.bf16 %v202, %v200
    %v233 = vpack.c.bf16 %v203, %v201
    %v234 = vpack.c.bf16 %v206, %v204
    %v235 = vpack.c.bf16 %v207, %v205
    %v236 = vpack.c.bf16 %v210, %v208
    %v237 = vpack.c.bf16 %v211, %v209
    %v238 = vpack.c.bf16 %v214, %v212
    %v239 = vpack.c.bf16 %v215, %v213
    %v240 = vpack.c.bf16 %v218, %v216
    %v241 = vpack.c.bf16 %v219, %v217
    %v242 = vpack.c.bf16 %v222, %v220
    %v243 = vpack.c.bf16 %v223, %v221
    %v244 = vpack.c.bf16 %v226, %v224
    %v245 = vpack.c.bf16 %v227, %v225
    %v246 = vpack.c.bf16 %v230, %v228
    %v247 = vpack.c.bf16 %v231, %v229
    %v248 = vld [vmem:[#allocation2] sm:$0xff]
    %v249 = vld [vmem:[#allocation2 + $0x8] sm:$0xff]
    %v250 = vld [vmem:[#allocation2 + $0x10] sm:$0xff]
    %v251 = vld [vmem:[#allocation2 + $0x18] sm:$0xff]
    %v252 = vld [vmem:[#allocation2 + $0x20] sm:$0xff]
    %v253 = vld [vmem:[#allocation2 + $0x28] sm:$0xff]
    %v254 = vld [vmem:[#allocation2 + $0x30] sm:$0xff]
    %v255 = vld [vmem:[#allocation2 + $0x38] sm:$0xff]
    %v256 = vld [vmem:[#allocation2 + $0x40] sm:$0xff]
    %v257 = vld [vmem:[#allocation2 + $0x48] sm:$0xff]
    %v258 = vld [vmem:[#allocation2 + $0x50] sm:$0xff]
    %v259 = vld [vmem:[#allocation2 + $0x58] sm:$0xff]
    %v260 = vld [vmem:[#allocation2 + $0x60] sm:$0xff]
    %v261 = vld [vmem:[#allocation2 + $0x68] sm:$0xff]
    %v262 = vld [vmem:[#allocation2 + $0x70] sm:$0xff]
    %v263 = vld [vmem:[#allocation2 + $0x78] sm:$0xff]
    %v264 = vld [vmem:[#allocation8] sm:$0xf]
    %v265 = vld [vmem:[#allocation8 + $0x4] sm:$0xf]
    %v266 = vld [vmem:[#allocation8 + $0x8] sm:$0xf]
    %v267 = vld [vmem:[#allocation8 + $0xc] sm:$0xf]
    %v268 = vld [vmem:[#allocation8 + $0x10] sm:$0xf]
    %v269 = vld [vmem:[#allocation8 + $0x14] sm:$0xf]
    %v270 = vld [vmem:[#allocation8 + $0x18] sm:$0xf]
    %v271 = vld [vmem:[#allocation8 + $0x1c] sm:$0xf]
    %v272 = vld [vmem:[#allocation8 + $0x20] sm:$0xf]
    %v273 = vld [vmem:[#allocation8 + $0x24] sm:$0xf]
    %v274 = vld [vmem:[#allocation8 + $0x28] sm:$0xf]
    %v275 = vld [vmem:[#allocation8 + $0x2c] sm:$0xf]
    %v276 = vld [vmem:[#allocation8 + $0x30] sm:$0xf]
    %v277 = vld [vmem:[#allocation8 + $0x34] sm:$0xf]
    %v278 = vld [vmem:[#allocation8 + $0x38] sm:$0xf]
    %v279 = vld [vmem:[#allocation8 + $0x3c] sm:$0xf]
    %v280 = vld [vmem:[#allocation8 + $0x40] sm:$0xf]
    %v281 = vld [vmem:[#allocation8 + $0x44] sm:$0xf]
    %v282 = vld [vmem:[#allocation8 + $0x48] sm:$0xf]
    %v283 = vld [vmem:[#allocation8 + $0x4c] sm:$0xf]
    %v284 = vld [vmem:[#allocation8 + $0x50] sm:$0xf]
    %v285 = vld [vmem:[#allocation8 + $0x54] sm:$0xf]
    %v286 = vld [vmem:[#allocation8 + $0x58] sm:$0xf]
    %v287 = vld [vmem:[#allocation8 + $0x5c] sm:$0xf]
    %v288 = vld [vmem:[#allocation8 + $0x60] sm:$0xf]
    %v289 = vld [vmem:[#allocation8 + $0x64] sm:$0xf]
    %v290 = vld [vmem:[#allocation8 + $0x68] sm:$0xf]
    %v291 = vld [vmem:[#allocation8 + $0x6c] sm:$0xf]
    %v292 = vld [vmem:[#allocation8 + $0x70] sm:$0xf]
    %v293 = vld [vmem:[#allocation8 + $0x74] sm:$0xf]
    %v294 = vld [vmem:[#allocation8 + $0x78] sm:$0xf]
    %v295 = vld [vmem:[#allocation8 + $0x7c] sm:$0xf]
    %v328 = vunpack.c.l.b16 %v264
    %v329 = vunpack.c.l.b16 %v265
    %v330 = vunpack.c.l.b16 %v266
    %v331 = vunpack.c.l.b16 %v267
    %v332 = vunpack.c.l.b16 %v268
    %v333 = vunpack.c.l.b16 %v269
    %v334 = vunpack.c.l.b16 %v270
    %v335 = vunpack.c.l.b16 %v271
    %v336 = vunpack.c.l.b16 %v272
    %v337 = vunpack.c.l.b16 %v273
    %v338 = vunpack.c.l.b16 %v274
    %v339 = vunpack.c.l.b16 %v275
    %v340 = vunpack.c.l.b16 %v276
    %v341 = vunpack.c.l.b16 %v277
    %v342 = vunpack.c.l.b16 %v278
    %v343 = vunpack.c.l.b16 %v279
    %v344 = vunpack.c.l.b16 %v280
    %v345 = vunpack.c.l.b16 %v281
    %v346 = vunpack.c.l.b16 %v282
    %v347 = vunpack.c.l.b16 %v283
    %v348 = vunpack.c.l.b16 %v284
    %v349 = vunpack.c.l.b16 %v285
    %v350 = vunpack.c.l.b16 %v286
    %v351 = vunpack.c.l.b16 %v287
    %v352 = vunpack.c.l.b16 %v288
    %v353 = vunpack.c.l.b16 %v289
    %v354 = vunpack.c.l.b16 %v290
    %v355 = vunpack.c.l.b16 %v291
    %v356 = vunpack.c.l.b16 %v292
    %v357 = vunpack.c.l.b16 %v293
    %v358 = vunpack.c.l.b16 %v294
    %v359 = vunpack.c.l.b16 %v295
    %v360 = vpack.c.b16 %v329, %v328
    %v361 = vpack.c.b16 %v331, %v330
    %v362 = vpack.c.b16 %v333, %v332
    %v363 = vpack.c.b16 %v335, %v334
    %v364 = vpack.c.b16 %v337, %v336
    %v365 = vpack.c.b16 %v339, %v338
    %v366 = vpack.c.b16 %v341, %v340
    %v367 = vpack.c.b16 %v343, %v342
    %v368 = vpack.c.b16 %v345, %v344
    %v369 = vpack.c.b16 %v347, %v346
    %v370 = vpack.c.b16 %v349, %v348
    %v371 = vpack.c.b16 %v351, %v350
    %v372 = vpack.c.b16 %v353, %v352
    %v373 = vpack.c.b16 %v355, %v354
    %v374 = vpack.c.b16 %v357, %v356
    %v375 = vpack.c.b16 %v359, %v358
    %392 = vmatprep.subr.bf16.mxu0 0
    %393 = vmatpush1.bf16.msra.mxu0 %v360
    %394 = vmatprep.subr.bf16.mxu0 0
    %395 = vmatpush1.bf16.msra.mxu0 %v361
    %396 = vmatprep.subr.bf16.mxu0 0
    %397 = vmatpush1.bf16.msra.mxu0 %v362
    %398 = vmatprep.subr.bf16.mxu0 0
    %399 = vmatpush1.bf16.msra.mxu0 %v363
    %400 = vmatprep.subr.bf16.mxu0 0
    %401 = vmatpush1.bf16.msra.mxu0 %v364
    %402 = vmatprep.subr.bf16.mxu0 0
    %403 = vmatpush1.bf16.msra.mxu0 %v365
    %404 = vmatprep.subr.bf16.mxu0 0
    %405 = vmatpush1.bf16.msra.mxu0 %v366
    %406 = vmatprep.subr.bf16.mxu0 0
    %407 = vmatpush1.bf16.msra.mxu0 %v367
    %408 = vmatprep.subr.bf16.mxu0 0
    %409 = vmatpush1.bf16.msra.mxu0 %v368
    %410 = vmatprep.subr.bf16.mxu0 0
    %411 = vmatpush1.bf16.msra.mxu0 %v369
    %412 = vmatprep.subr.bf16.mxu0 0
    %413 = vmatpush1.bf16.msra.mxu0 %v370
    %414 = vmatprep.subr.bf16.mxu0 0
    %415 = vmatpush1.bf16.msra.mxu0 %v371
    %416 = vmatprep.subr.bf16.mxu0 0
    %417 = vmatpush1.bf16.msra.mxu0 %v372
    %418 = vmatprep.subr.bf16.mxu0 0
    %419 = vmatpush1.bf16.msra.mxu0 %v373
    %420 = vmatprep.subr.bf16.mxu0 0
    %421 = vmatpush1.bf16.msra.mxu0 %v374
    %422 = vmatprep.subr.bf16.mxu0 0
    %423 = vmatpush1.bf16.msra.mxu0 %v375
    %424 = vmatprep.mubr.bf16.mxu0 %v233
    %425 = vmatmul.mubr.bf16.gmra.mrb[0].mxu0 %v232
    %v426 = vpop.f32.mrb[0].mxu0
    %v427 = vadd.f32 0.0, %v426
    %v428 = vpop.f32.mrb[0].mxu0
    %v429 = vpop.f32.mrb[0].mxu0
    %v430 = vadd.f32 0.0, %v429
    %v431 = vpop.f32.mrb[0].mxu0
    %432 = vmatprep.mubr.bf16.mxu0 %v235
    %433 = vmatmul.mubr.bf16.gmra.mrb[0].mxu0 %v234
    %v434 = vpop.f32.mrb[0].mxu0
    %v435 = vadd.f32 0.0, %v434
    %v436 = vpop.f32.mrb[0].mxu0
    %v437 = vpop.f32.mrb[0].mxu0
    %v438 = vadd.f32 0.0, %v437
    %v439 = vpop.f32.mrb[0].mxu0
    %440 = vmatprep.mubr.bf16.mxu0 %v237
    %441 = vmatmul.mubr.bf16.gmra.mrb[0].mxu0 %v236
    %v442 = vpop.f32.mrb[0].mxu0
    %v443 = vadd.f32 0.0, %v442
    %v444 = vpop.f32.mrb[0].mxu0
    %v445 = vpop.f32.mrb[0].mxu0
    %v446 = vadd.f32 0.0, %v445
    %v447 = vpop.f32.mrb[0].mxu0
    %448 = vmatprep.mubr.bf16.mxu0 %v239
    %449 = vmatmul.mubr.bf16.gmra.mrb[0].mxu0 %v238
    %v450 = vpop.f32.mrb[0].mxu0
    %v451 = vadd.f32 0.0, %v450
    %v452 = vpop.f32.mrb[0].mxu0
    %v453 = vpop.f32.mrb[0].mxu0
    %v454 = vadd.f32 0.0, %v453
    %v455 = vpop.f32.mrb[0].mxu0
    %456 = vmatprep.mubr.bf16.mxu0 %v241
    %457 = vmatmul.mubr.bf16.gmra.mrb[0].mxu0 %v240
    %v458 = vpop.f32.mrb[0].mxu0
    %v459 = vadd.f32 0.0, %v458
    %v460 = vpop.f32.mrb[0].mxu0
    %v461 = vpop.f32.mrb[0].mxu0
    %v462 = vadd.f32 0.0, %v461
    %v463 = vpop.f32.mrb[0].mxu0
    %464 = vmatprep.mubr.bf16.mxu0 %v243
    %465 = vmatmul.mubr.bf16.gmra.mrb[0].mxu0 %v242
    %v466 = vpop.f32.mrb[0].mxu0
    %v467 = vadd.f32 0.0, %v466
    %v468 = vpop.f32.mrb[0].mxu0
    %v469 = vpop.f32.mrb[0].mxu0
    %v470 = vadd.f32 0.0, %v469
    %v471 = vpop.f32.mrb[0].mxu0
    %472 = vmatprep.mubr.bf16.mxu0 %v245
    %473 = vmatmul.mubr.bf16.gmra.mrb[0].mxu0 %v244
    %v474 = vpop.f32.mrb[0].mxu0
    %v475 = vadd.f32 0.0, %v474
    %v476 = vpop.f32.mrb[0].mxu0
    %v477 = vpop.f32.mrb[0].mxu0
    %v478 = vadd.f32 0.0, %v477
    %v479 = vpop.f32.mrb[0].mxu0
    %480 = vmatprep.mubr.bf16.mxu0 %v247
    %481 = vmatmul.mubr.bf16.gmra.mrb[0].mxu0 %v246
    %v482 = vpop.f32.mrb[0].mxu0
    %v483 = vadd.f32 0.0, %v482
    %v484 = vpop.f32.mrb[0].mxu0
    %v485 = vpop.f32.mrb[0].mxu0
    %v486 = vadd.f32 0.0, %v485
    %v487 = vpop.f32.mrb[0].mxu0
    %488 = vdwg.mxu0
    %v489 = vadd.f32 %v248, %v427
    %v490 = vadd.f32 %v249, %v430
    %v491 = vadd.f32 %v250, %v435
    %v492 = vadd.f32 %v251, %v438
    %v493 = vadd.f32 %v252, %v443
    %v494 = vadd.f32 %v253, %v446
    %v495 = vadd.f32 %v254, %v451
    %v496 = vadd.f32 %v255, %v454
    %v497 = vadd.f32 %v256, %v459
    %v498 = vadd.f32 %v257, %v462
    %v499 = vadd.f32 %v258, %v467
    %v500 = vadd.f32 %v259, %v470
    %v501 = vadd.f32 %v260, %v475
    %v502 = vadd.f32 %v261, %v478
    %v503 = vadd.f32 %v262, %v483
    %v504 = vadd.f32 %v263, %v486
    %505 = vst [vmem:[#allocation2] sm:$0xff] %v489
    %506 = vst [vmem:[#allocation2 + $0x8] sm:$0xff] %v490
    %507 = vst [vmem:[#allocation2 + $0x10] sm:$0xff] %v491
    %508 = vst [vmem:[#allocation2 + $0x18] sm:$0xff] %v492
    %509 = vst [vmem:[#allocation2 + $0x20] sm:$0xff] %v493
    %510 = vst [vmem:[#allocation2 + $0x28] sm:$0xff] %v494
    %511 = vst [vmem:[#allocation2 + $0x30] sm:$0xff] %v495
    %512 = vst [vmem:[#allocation2 + $0x38] sm:$0xff] %v496
    %513 = vst [vmem:[#allocation2 + $0x40] sm:$0xff] %v497
    %514 = vst [vmem:[#allocation2 + $0x48] sm:$0xff] %v498
    %515 = vst [vmem:[#allocation2 + $0x50] sm:$0xff] %v499
    %516 = vst [vmem:[#allocation2 + $0x58] sm:$0xff] %v500
    %517 = vst [vmem:[#allocation2 + $0x60] sm:$0xff] %v501
    %518 = vst [vmem:[#allocation2 + $0x68] sm:$0xff] %v502
    %519 = vst [vmem:[#allocation2 + $0x70] sm:$0xff] %v503
    %520 = vst [vmem:[#allocation2 + $0x78] sm:$0xff] %v504
    %v521 = vld [vmem:[#allocation3] sm:$0xff]
    %v522 = vld [vmem:[#allocation3 + $0x8] sm:$0xff]
    %v523 = vld [vmem:[#allocation3 + $0x10] sm:$0xff]
    %v524 = vld [vmem:[#allocation3 + $0x18] sm:$0xff]
    %v525 = vld [vmem:[#allocation3 + $0x20] sm:$0xff]
    %v526 = vld [vmem:[#allocation3 + $0x28] sm:$0xff]
    %v527 = vld [vmem:[#allocation3 + $0x30] sm:$0xff]
    %v528 = vld [vmem:[#allocation3 + $0x38] sm:$0xff]
    %v529 = vld [vmem:[#allocation3 + $0x40] sm:$0xff]
    %v530 = vld [vmem:[#allocation3 + $0x48] sm:$0xff]
    %v531 = vld [vmem:[#allocation3 + $0x50] sm:$0xff]
    %v532 = vld [vmem:[#allocation3 + $0x58] sm:$0xff]
    %v533 = vld [vmem:[#allocation3 + $0x60] sm:$0xff]
    %v534 = vld [vmem:[#allocation3 + $0x68] sm:$0xff]
    %v535 = vld [vmem:[#allocation3 + $0x70] sm:$0xff]
    %v536 = vld [vmem:[#allocation3 + $0x78] sm:$0xff]
    %v537 = vadd.f32 %v200, %v201
    %538 = vadd.xlane.f32.xlu0 %v537
    %v539 = vpop.xlane.xlu0 %538
    %v540 = vadd.f32 %v202, %v203
    %541 = vadd.xlane.f32.xlu0 %v540
    %v542 = vpop.xlane.xlu0 %541
    %v543 = vadd.f32 %v204, %v205
    %544 = vadd.xlane.f32.xlu0 %v543
    %v545 = vpop.xlane.xlu0 %544
    %v546 = vadd.f32 %v206, %v207
    %547 = vadd.xlane.f32.xlu0 %v546
    %v548 = vpop.xlane.xlu0 %547
    %v549 = vadd.f32 %v208, %v209
    %550 = vadd.xlane.f32.xlu0 %v549
    %v551 = vpop.xlane.xlu0 %550
    %v552 = vadd.f32 %v210, %v211
    %553 = vadd.xlane.f32.xlu0 %v552
    %v554 = vpop.xlane.xlu0 %553
    %v555 = vadd.f32 %v212, %v213
    %556 = vadd.xlane.f32.xlu0 %v555
    %v557 = vpop.xlane.xlu0 %556
    %v558 = vadd.f32 %v214, %v215
    %559 = vadd.xlane.f32.xlu0 %v558
    %v560 = vpop.xlane.xlu0 %559
    %v561 = vadd.f32 %v216, %v217
    %562 = vadd.xlane.f32.xlu0 %v561
    %v563 = vpop.xlane.xlu0 %562
    %v564 = vadd.f32 %v218, %v219
    %565 = vadd.xlane.f32.xlu0 %v564
    %v566 = vpop.xlane.xlu0 %565
    %v567 = vadd.f32 %v220, %v221
    %568 = vadd.xlane.f32.xlu0 %v567
    %v569 = vpop.xlane.xlu0 %568
    %v570 = vadd.f32 %v222, %v223
    %571 = vadd.xlane.f32.xlu0 %v570
    %v572 = vpop.xlane.xlu0 %571
    %v573 = vadd.f32 %v224, %v225
    %574 = vadd.xlane.f32.xlu0 %v573
    %v575 = vpop.xlane.xlu0 %574
    %v576 = vadd.f32 %v226, %v227
    %577 = vadd.xlane.f32.xlu0 %v576
    %v578 = vpop.xlane.xlu0 %577
    %v579 = vadd.f32 %v228, %v229
    %580 = vadd.xlane.f32.xlu0 %v579
    %v581 = vpop.xlane.xlu0 %580
    %v582 = vadd.f32 %v230, %v231
    %583 = vadd.xlane.f32.xlu0 %v582
    %v584 = vpop.xlane.xlu0 %583
    %v585 = vadd.f32 %v521, %v539
    %v586 = vadd.f32 %v522, %v542
    %v587 = vadd.f32 %v523, %v545
    %v588 = vadd.f32 %v524, %v548
    %v589 = vadd.f32 %v525, %v551
    %v590 = vadd.f32 %v526, %v554
    %v591 = vadd.f32 %v527, %v557
    %v592 = vadd.f32 %v528, %v560
    %v593 = vadd.f32 %v529, %v563
    %v594 = vadd.f32 %v530, %v566
    %v595 = vadd.f32 %v531, %v569
    %v596 = vadd.f32 %v532, %v572
    %v597 = vadd.f32 %v533, %v575
    %v598 = vadd.f32 %v534, %v578
    %v599 = vadd.f32 %v535, %v581
    %v600 = vadd.f32 %v536, %v584
    %vm601 = vcmask 7168
    %602 = vst.msk [vmem:[#allocation3] sm:$0xff] %vm601, %v585
    %603 = vst.msk [vmem:[#allocation3 + $0x8] sm:$0xff] %vm601, %v586
    %604 = vst.msk [vmem:[#allocation3 + $0x10] sm:$0xff] %vm601, %v587
    %605 = vst.msk [vmem:[#allocation3 + $0x18] sm:$0xff] %vm601, %v588
    %606 = vst.msk [vmem:[#allocation3 + $0x20] sm:$0xff] %vm601, %v589
    %607 = vst.msk [vmem:[#allocation3 + $0x28] sm:$0xff] %vm601, %v590
    %608 = vst.msk [vmem:[#allocation3 + $0x30] sm:$0xff] %vm601, %v591
    %609 = vst.msk [vmem:[#allocation3 + $0x38] sm:$0xff] %vm601, %v592
    %610 = vst.msk [vmem:[#allocation3 + $0x40] sm:$0xff] %vm601, %v593
    %611 = vst.msk [vmem:[#allocation3 + $0x48] sm:$0xff] %vm601, %v594
    %612 = vst.msk [vmem:[#allocation3 + $0x50] sm:$0xff] %vm601, %v595
    %613 = vst.msk [vmem:[#allocation3 + $0x58] sm:$0xff] %vm601, %v596
    %614 = vst.msk [vmem:[#allocation3 + $0x60] sm:$0xff] %vm601, %v597
    %615 = vst.msk [vmem:[#allocation3 + $0x68] sm:$0xff] %vm601, %v598
    %616 = vst.msk [vmem:[#allocation3 + $0x70] sm:$0xff] %vm601, %v599
    %617 = vst.msk [vmem:[#allocation3 + $0x78] sm:$0xff] %vm601, %v600
    // Predicated region
    $region42: #{tpu_custom_call.1} parent=1 // pred_check
      %p618 = pneg %p67
    $region43: #{tpu_custom_call.1} parent=1 // pred_check_branch
      %620 = sbr.rel (%p618) target = $region45
    $region44: #{tpu_custom_call.1} parent=1 // pred_region
      %v621 = vld [vmem:[#allocation3] sm:$0xff]
      %v622 = vld [vmem:[#allocation3 + $0x8] sm:$0xff]
      %v623 = vld [vmem:[#allocation3 + $0x10] sm:$0xff]
      %v624 = vld [vmem:[#allocation3 + $0x18] sm:$0xff]
      %v625 = vld [vmem:[#allocation3 + $0x20] sm:$0xff]
      %v626 = vld [vmem:[#allocation3 + $0x28] sm:$0xff]
      %v627 = vld [vmem:[#allocation3 + $0x30] sm:$0xff]
      %v628 = vld [vmem:[#allocation3 + $0x38] sm:$0xff]
      %v629 = vld [vmem:[#allocation3 + $0x40] sm:$0xff]
      %v630 = vld [vmem:[#allocation3 + $0x48] sm:$0xff]
      %v631 = vld [vmem:[#allocation3 + $0x50] sm:$0xff]
      %v632 = vld [vmem:[#allocation3 + $0x58] sm:$0xff]
      %v633 = vld [vmem:[#allocation3 + $0x60] sm:$0xff]
      %v634 = vld [vmem:[#allocation3 + $0x68] sm:$0xff]
      %v635 = vld [vmem:[#allocation3 + $0x70] sm:$0xff]
      %v636 = vld [vmem:[#allocation3 + $0x78] sm:$0xff]
      %v637 = vadd.f32 %v621, 1e-06
      %v638 = vadd.f32 %v622, 1e-06
      %v639 = vadd.f32 %v623, 1e-06
      %v640 = vadd.f32 %v624, 1e-06
      %v641 = vadd.f32 %v625, 1e-06
      %v642 = vadd.f32 %v626, 1e-06
      %v643 = vadd.f32 %v627, 1e-06
      %v644 = vadd.f32 %v628, 1e-06
      %v645 = vadd.f32 %v629, 1e-06
      %v646 = vadd.f32 %v630, 1e-06
      %v647 = vadd.f32 %v631, 1e-06
      %v648 = vadd.f32 %v632, 1e-06
      %v649 = vadd.f32 %v633, 1e-06
      %v650 = vadd.f32 %v634, 1e-06
      %v651 = vadd.f32 %v635, 1e-06
      %v652 = vadd.f32 %v636, 1e-06
      %v653 = vrcp.pop %v637
      %v654 = vrcp.pop %v638
      %v655 = vrcp.pop %v639
      %v656 = vrcp.pop %v640
      %v657 = vrcp.pop %v641
      %v658 = vrcp.pop %v642
      %v659 = vrcp.pop %v643
      %v660 = vrcp.pop %v644
      %v661 = vrcp.pop %v645
      %v662 = vrcp.pop %v646
      %v663 = vrcp.pop %v647
      %v664 = vrcp.pop %v648
      %v665 = vrcp.pop %v649
      %v666 = vrcp.pop %v650
      %v667 = vrcp.pop %v651
      %v668 = vrcp.pop %v652
      %v669 = vld [vmem:[#allocation2] sm:$0xff]
      %v670 = vld [vmem:[#allocation2 + $0x8] sm:$0xff]
      %v671 = vld [vmem:[#allocation2 + $0x10] sm:$0xff]
      %v672 = vld [vmem:[#allocation2 + $0x18] sm:$0xff]
      %v673 = vld [vmem:[#allocation2 + $0x20] sm:$0xff]
      %v674 = vld [vmem:[#allocation2 + $0x28] sm:$0xff]
      %v675 = vld [vmem:[#allocation2 + $0x30] sm:$0xff]
      %v676 = vld [vmem:[#allocation2 + $0x38] sm:$0xff]
      %v677 = vld [vmem:[#allocation2 + $0x40] sm:$0xff]
      %v678 = vld [vmem:[#allocation2 + $0x48] sm:$0xff]
      %v679 = vld [vmem:[#allocation2 + $0x50] sm:$0xff]
      %v680 = vld [vmem:[#allocation2 + $0x58] sm:$0xff]
      %v681 = vld [vmem:[#allocation2 + $0x60] sm:$0xff]
      %v682 = vld [vmem:[#allocation2 + $0x68] sm:$0xff]
      %v683 = vld [vmem:[#allocation2 + $0x70] sm:$0xff]
      %v684 = vld [vmem:[#allocation2 + $0x78] sm:$0xff]
      %686 = vset.pattern.permute.xlu0 0
      %687 = vperm.xlu0 %686, %v653
      %v688 = vpop.permute.xlu0 %687
      %691 = vset.pattern.permute.xlu0 0
      %692 = vperm.xlu0 %691, %v654
      %v693 = vpop.permute.xlu0 %692
      %696 = vset.pattern.permute.xlu0 0
      %697 = vperm.xlu0 %696, %v655
      %v698 = vpop.permute.xlu0 %697
      %701 = vset.pattern.permute.xlu0 0
      %702 = vperm.xlu0 %701, %v656
      %v703 = vpop.permute.xlu0 %702
      %706 = vset.pattern.permute.xlu0 0
      %707 = vperm.xlu0 %706, %v657
      %v708 = vpop.permute.xlu0 %707
      %711 = vset.pattern.permute.xlu0 0
      %712 = vperm.xlu0 %711, %v658
      %v713 = vpop.permute.xlu0 %712
      %716 = vset.pattern.permute.xlu0 0
      %717 = vperm.xlu0 %716, %v659
      %v718 = vpop.permute.xlu0 %717
      %721 = vset.pattern.permute.xlu0 0
      %722 = vperm.xlu0 %721, %v660
      %v723 = vpop.permute.xlu0 %722
      %726 = vset.pattern.permute.xlu0 0
      %727 = vperm.xlu0 %726, %v661
      %v728 = vpop.permute.xlu0 %727
      %731 = vset.pattern.permute.xlu0 0
      %732 = vperm.xlu0 %731, %v662
      %v733 = vpop.permute.xlu0 %732
      %736 = vset.pattern.permute.xlu0 0
      %737 = vperm.xlu0 %736, %v663
      %v738 = vpop.permute.xlu0 %737
      %741 = vset.pattern.permute.xlu0 0
      %742 = vperm.xlu0 %741, %v664
      %v743 = vpop.permute.xlu0 %742
      %746 = vset.pattern.permute.xlu0 0
      %747 = vperm.xlu0 %746, %v665
      %v748 = vpop.permute.xlu0 %747
      %751 = vset.pattern.permute.xlu0 0
      %752 = vperm.xlu0 %751, %v666
      %v753 = vpop.permute.xlu0 %752
      %756 = vset.pattern.permute.xlu0 0
      %757 = vperm.xlu0 %756, %v667
      %v758 = vpop.permute.xlu0 %757
      %761 = vset.pattern.permute.xlu0 0
      %762 = vperm.xlu0 %761, %v668
      %v763 = vpop.permute.xlu0 %762
      %v765 = vmul.f32 %v669, %v688
      %v766 = vmul.f32 %v670, %v693
      %v767 = vmul.f32 %v671, %v698
      %v768 = vmul.f32 %v672, %v703
      %v769 = vmul.f32 %v673, %v708
      %v770 = vmul.f32 %v674, %v713
      %v771 = vmul.f32 %v675, %v718
      %v772 = vmul.f32 %v676, %v723
      %v773 = vmul.f32 %v677, %v728
      %v774 = vmul.f32 %v678, %v733
      %v775 = vmul.f32 %v679, %v738
      %v776 = vmul.f32 %v680, %v743
      %v777 = vmul.f32 %v681, %v748
      %v778 = vmul.f32 %v682, %v753
      %v779 = vmul.f32 %v683, %v758
      %v780 = vmul.f32 %v684, %v763
      %v781 = vld [vmem:[#allocation10] sm:$0xff]
      %v782 = vld [vmem:[#allocation10 + $0x8] sm:$0xff]
      %v783 = vld [vmem:[#allocation10 + $0x10] sm:$0xff]
      %v784 = vld [vmem:[#allocation10 + $0x18] sm:$0xff]
      %v785 = vld [vmem:[#allocation10 + $0x20] sm:$0xff]
      %v786 = vld [vmem:[#allocation10 + $0x28] sm:$0xff]
      %v787 = vld [vmem:[#allocation10 + $0x30] sm:$0xff]
      %v788 = vld [vmem:[#allocation10 + $0x38] sm:$0xff]
      %v789 = vld [vmem:[#allocation10 + $0x40] sm:$0xff]
      %v790 = vld [vmem:[#allocation10 + $0x48] sm:$0xff]
      %v791 = vld [vmem:[#allocation10 + $0x50] sm:$0xff]
      %v792 = vld [vmem:[#allocation10 + $0x58] sm:$0xff]
      %v793 = vld [vmem:[#allocation10 + $0x60] sm:$0xff]
      %v794 = vld [vmem:[#allocation10 + $0x68] sm:$0xff]
      %v795 = vld [vmem:[#allocation10 + $0x70] sm:$0xff]
      %v796 = vld [vmem:[#allocation10 + $0x78] sm:$0xff]
      %v797 = vld [vmem:[%s3] sm:$0x1]
      %v799 = vlaneseq
      %v800 = vshrl.u32 %v799, 7
      %v801 = vsub.s32 0, %v800
      %v802 = vrot.slane %v797, %v801
      %804 = vmatprep.subr.mxu0 0.0
      %805 = vmatpush1.msra.mxu0 %v781
      %806 = vmatprep.subr.mxu0 0.0
      %807 = vmatpush1.msra.mxu0 %v782
      %808 = vmatprep.subr.mxu0 0.0
      %809 = vmatpush1.msra.mxu0 %v783
      %810 = vmatprep.subr.mxu0 0.0
      %811 = vmatpush1.msra.mxu0 %v784
      %812 = vmatprep.subr.mxu0 0.0
      %813 = vmatpush1.msra.mxu0 %v785
      %814 = vmatprep.subr.mxu0 0.0
      %815 = vmatpush1.msra.mxu0 %v786
      %816 = vmatprep.subr.mxu0 0.0
      %817 = vmatpush1.msra.mxu0 %v787
      %818 = vmatprep.subr.mxu0 0.0
      %819 = vmatpush1.msra.mxu0 %v788
      %820 = vmatprep.subr.mxu0 0.0
      %821 = vmatpush1.msra.mxu0 %v789
      %822 = vmatprep.subr.mxu0 0.0
      %823 = vmatpush1.msra.mxu0 %v790
      %824 = vmatprep.subr.mxu0 0.0
      %825 = vmatpush1.msra.mxu0 %v791
      %826 = vmatprep.subr.mxu0 0.0
      %827 = vmatpush1.msra.mxu0 %v792
      %828 = vmatprep.subr.mxu0 0.0
      %829 = vmatpush1.msra.mxu0 %v793
      %830 = vmatprep.subr.mxu0 0.0
      %831 = vmatpush1.msra.mxu0 %v794
      %832 = vmatprep.subr.mxu0 0.0
      %833 = vmatpush1.msra.mxu0 %v795
      %834 = vmatprep.subr.mxu0 0.0
      %835 = vmatpush1.msra.mxu0 %v796
      %836 = vmatprep.subr.mxu0 0.0
      %837 = vmatpush1.msra.mxu0 0.0
      %838 = vmatprep.subr.mxu0 0.0
      %839 = vmatpush1.msra.mxu0 0.0
      %840 = vmatprep.subr.mxu0 0.0
      %841 = vmatpush1.msra.mxu0 0.0
      %842 = vmatprep.subr.mxu0 0.0
      %843 = vmatpush1.msra.mxu0 0.0
      %844 = vmatprep.subr.mxu0 0.0
      %845 = vmatpush1.msra.mxu0 0.0
      %846 = vmatprep.subr.mxu0 0.0
      %847 = vmatpush1.msra.mxu0 0.0
      %848 = vmatprep.subr.mxu0 0.0
      %849 = vmatpush1.msra.mxu0 0.0
      %850 = vmatprep.subr.mxu0 0.0
      %851 = vmatpush1.msra.mxu0 0.0
      %852 = vmatprep.subr.mxu0 0.0
      %853 = vmatpush1.msra.mxu0 0.0
      %854 = vmatprep.subr.mxu0 0.0
      %855 = vmatpush1.msra.mxu0 0.0
      %856 = vmatprep.subr.mxu0 0.0
      %857 = vmatpush1.msra.mxu0 0.0
      %858 = vmatprep.subr.mxu0 0.0
      %859 = vmatpush1.msra.mxu0 0.0
      %860 = vmatprep.subr.mxu0 0.0
      %861 = vmatpush1.msra.mxu0 0.0
      %862 = vmatprep.subr.mxu0 0.0
      %863 = vmatpush1.msra.mxu0 0.0
      %864 = vmatprep.subr.mxu0 0.0
      %865 = vmatpush1.msra.mxu0 0.0
      %866 = vmatprep.subr.mxu0 0.0
      %867 = vmatpush1.msra.mxu0 0.0
      %868 = vmatprep.mubr.f32.mxu0 0.0
      %869 = vmatmul.mubr.f32.gmra.mrb[0].mxu0 %v765
      %v870 = vpop.f32.mrb[0].mxu0
      %v871 = vadd.f32 %v802, %v870
      %v872 = vpop.f32.mrb[0].mxu0
      %873 = vmatprep.mubr.f32.mxu0 0.0
      %874 = vmatmul.mubr.f32.gmra.mrb[0].mxu0 %v766
      %v875 = vpop.f32.mrb[0].mxu0
      %v876 = vadd.f32 %v802, %v875
      %v877 = vpop.f32.mrb[0].mxu0
      %878 = vmatprep.mubr.f32.mxu0 0.0
      %879 = vmatmul.mubr.f32.gmra.mrb[0].mxu0 %v767
      %v880 = vpop.f32.mrb[0].mxu0
      %v881 = vadd.f32 %v802, %v880
      %v882 = vpop.f32.mrb[0].mxu0
      %883 = vmatprep.mubr.f32.mxu0 0.0
      %884 = vmatmul.mubr.f32.gmra.mrb[0].mxu0 %v768
      %v885 = vpop.f32.mrb[0].mxu0
      %v886 = vadd.f32 %v802, %v885
      %v887 = vpop.f32.mrb[0].mxu0
      %888 = vmatprep.mubr.f32.mxu0 0.0
      %889 = vmatmul.mubr.f32.gmra.mrb[0].mxu0 %v769
      %v890 = vpop.f32.mrb[0].mxu0
      %v891 = vadd.f32 %v802, %v890
      %v892 = vpop.f32.mrb[0].mxu0
      %893 = vmatprep.mubr.f32.mxu0 0.0
      %894 = vmatmul.mubr.f32.gmra.mrb[0].mxu0 %v770
      %v895 = vpop.f32.mrb[0].mxu0
      %v896 = vadd.f32 %v802, %v895
      %v897 = vpop.f32.mrb[0].mxu0
      %898 = vmatprep.mubr.f32.mxu0 0.0
      %899 = vmatmul.mubr.f32.gmra.mrb[0].mxu0 %v771
      %v900 = vpop.f32.mrb[0].mxu0
      %v901 = vadd.f32 %v802, %v900
      %v902 = vpop.f32.mrb[0].mxu0
      %903 = vmatprep.mubr.f32.mxu0 0.0
      %904 = vmatmul.mubr.f32.gmra.mrb[0].mxu0 %v772
      %v905 = vpop.f32.mrb[0].mxu0
      %v906 = vadd.f32 %v802, %v905
      %v907 = vpop.f32.mrb[0].mxu0
      %908 = vmatprep.mubr.f32.mxu0 0.0
      %909 = vmatmul.mubr.f32.gmra.mrb[0].mxu0 %v773
      %v910 = vpop.f32.mrb[0].mxu0
      %v911 = vadd.f32 %v802, %v910
      %v912 = vpop.f32.mrb[0].mxu0
      %913 = vmatprep.mubr.f32.mxu0 0.0
      %914 = vmatmul.mubr.f32.gmra.mrb[0].mxu0 %v774
      %v915 = vpop.f32.mrb[0].mxu0
      %v916 = vadd.f32 %v802, %v915
      %v917 = vpop.f32.mrb[0].mxu0
      %918 = vmatprep.mubr.f32.mxu0 0.0
      %919 = vmatmul.mubr.f32.gmra.mrb[0].mxu0 %v775
      %v920 = vpop.f32.mrb[0].mxu0
      %v921 = vadd.f32 %v802, %v920
      %v922 = vpop.f32.mrb[0].mxu0
      %923 = vmatprep.mubr.f32.mxu0 0.0
      %924 = vmatmul.mubr.f32.gmra.mrb[0].mxu0 %v776
      %v925 = vpop.f32.mrb[0].mxu0
      %v926 = vadd.f32 %v802, %v925
      %v927 = vpop.f32.mrb[0].mxu0
      %928 = vmatprep.mubr.f32.mxu0 0.0
      %929 = vmatmul.mubr.f32.gmra.mrb[0].mxu0 %v777
      %v930 = vpop.f32.mrb[0].mxu0
      %v931 = vadd.f32 %v802, %v930
      %v932 = vpop.f32.mrb[0].mxu0
      %933 = vmatprep.mubr.f32.mxu0 0.0
      %934 = vmatmul.mubr.f32.gmra.mrb[0].mxu0 %v778
      %v935 = vpop.f32.mrb[0].mxu0
      %v936 = vadd.f32 %v802, %v935
      %v937 = vpop.f32.mrb[0].mxu0
      %938 = vmatprep.mubr.f32.mxu0 0.0
      %939 = vmatmul.mubr.f32.gmra.mrb[0].mxu0 %v779
      %v940 = vpop.f32.mrb[0].mxu0
      %v941 = vadd.f32 %v802, %v940
      %v942 = vpop.f32.mrb[0].mxu0
      %943 = vmatprep.mubr.f32.mxu0 0.0
      %944 = vmatmul.mubr.f32.gmra.mrb[0].mxu0 %v780
      %v945 = vpop.f32.mrb[0].mxu0
      %v946 = vadd.f32 %v802, %v945
      %v947 = vpop.f32.mrb[0].mxu0
      %948 = vdwg.mxu0
      %v949 = vmax.f32 %v871, 0.0
      %v950 = vmax.f32 %v876, 0.0
      %v951 = vmax.f32 %v881, 0.0
      %v952 = vmax.f32 %v886, 0.0
      %v953 = vmax.f32 %v891, 0.0
      %v954 = vmax.f32 %v896, 0.0
      %v955 = vmax.f32 %v901, 0.0
      %v956 = vmax.f32 %v906, 0.0
      %v957 = vmax.f32 %v911, 0.0
      %v958 = vmax.f32 %v916, 0.0
      %v959 = vmax.f32 %v921, 0.0
      %v960 = vmax.f32 %v926, 0.0
      %v961 = vmax.f32 %v931, 0.0
      %v962 = vmax.f32 %v936, 0.0
      %v963 = vmax.f32 %v941, 0.0
      %v964 = vmax.f32 %v946, 0.0
      %v965 = vld [vmem:[%s4] sm:$0x1]
      %v967 = vlaneseq
      %v968 = vshrl.u32 %v967, 7
      %v969 = vsub.s32 0, %v968
      %v970 = vrot.slane %v965, %v969
      %v972 = vmul.f32 %v949, %v970
      %v973 = vmul.f32 %v950, %v970
      %v974 = vmul.f32 %v951, %v970
      %v975 = vmul.f32 %v952, %v970
      %v976 = vmul.f32 %v953, %v970
      %v977 = vmul.f32 %v954, %v970
      %v978 = vmul.f32 %v955, %v970
      %v979 = vmul.f32 %v956, %v970
      %v980 = vmul.f32 %v957, %v970
      %v981 = vmul.f32 %v958, %v970
      %v982 = vmul.f32 %v959, %v970
      %v983 = vmul.f32 %v960, %v970
      %v984 = vmul.f32 %v961, %v970
      %v985 = vmul.f32 %v962, %v970
      %v986 = vmul.f32 %v963, %v970
      %v987 = vmul.f32 %v964, %v970
      %988 = vadd.xlane.f32.xlu0 %v972
      %v989 = vpop.xlane.xlu0 %988
      %990 = vadd.xlane.f32.xlu0 %v973
      %v991 = vpop.xlane.xlu0 %990
      %992 = vadd.xlane.f32.xlu0 %v974
      %v993 = vpop.xlane.xlu0 %992
      %994 = vadd.xlane.f32.xlu0 %v975
      %v995 = vpop.xlane.xlu0 %994
      %996 = vadd.xlane.f32.xlu0 %v976
      %v997 = vpop.xlane.xlu0 %996
      %998 = vadd.xlane.f32.xlu0 %v977
      %v999 = vpop.xlane.xlu0 %998
      %1000 = vadd.xlane.f32.xlu0 %v978
      %v1001 = vpop.xlane.xlu0 %1000
      %1002 = vadd.xlane.f32.xlu0 %v979
      %v1003 = vpop.xlane.xlu0 %1002
      %1004 = vadd.xlane.f32.xlu0 %v980
      %v1005 = vpop.xlane.xlu0 %1004
      %1006 = vadd.xlane.f32.xlu0 %v981
      %v1007 = vpop.xlane.xlu0 %1006
      %1008 = vadd.xlane.f32.xlu0 %v982
      %v1009 = vpop.xlane.xlu0 %1008
      %1010 = vadd.xlane.f32.xlu0 %v983
      %v1011 = vpop.xlane.xlu0 %1010
      %1012 = vadd.xlane.f32.xlu0 %v984
      %v1013 = vpop.xlane.xlu0 %1012
      %1014 = vadd.xlane.f32.xlu0 %v985
      %v1015 = vpop.xlane.xlu0 %1014
      %1016 = vadd.xlane.f32.xlu0 %v986
      %v1017 = vpop.xlane.xlu0 %1016
      %1018 = vadd.xlane.f32.xlu0 %v987
      %v1019 = vpop.xlane.xlu0 %1018
      %s1020 = sld [smem:[#allocation4]]
      %v1021 = vstv %s1020
      %v1022 = vadd.f32 %v989, %v1021
      %v1023 = vadd.f32 %v991, %v1021
      %v1024 = vadd.f32 %v993, %v1021
      %v1025 = vadd.f32 %v995, %v1021
      %v1026 = vadd.f32 %v997, %v1021
      %v1027 = vadd.f32 %v999, %v1021
      %v1028 = vadd.f32 %v1001, %v1021
      %v1029 = vadd.f32 %v1003, %v1021
      %v1030 = vadd.f32 %v1005, %v1021
      %v1031 = vadd.f32 %v1007, %v1021
      %v1032 = vadd.f32 %v1009, %v1021
      %v1033 = vadd.f32 %v1011, %v1021
      %v1034 = vadd.f32 %v1013, %v1021
      %v1035 = vadd.f32 %v1015, %v1021
      %v1036 = vadd.f32 %v1017, %v1021
      %v1037 = vadd.f32 %v1019, %v1021
      %v1054 = vlaneseq
      %v1055 = vand.u32 %v1054, 127
      %v1056 = vlaneseq
      %v1057 = vshrl.u32 %v1056, 7
      %v1058 = vsub.s32 %v1055, %v1057
      %v1059 = vrot.slane %v1022, %v1058
      %v1060 = vadd.s32 %v1055, 4294967288
      %v1061 = vlaneseq
      %v1062 = vshrl.u32 %v1061, 7
      %v1063 = vsub.s32 %v1060, %v1062
      %v1064 = vrot.slane %v1023, %v1063
      %vm1065 = vcmask 130112
      %v1066 = vsel %vm1065, %v1064, %v1059
      %v1067 = vadd.s32 %v1055, 4294967280
      %v1068 = vlaneseq
      %v1069 = vshrl.u32 %v1068, 7
      %v1070 = vsub.s32 %v1067, %v1069
      %v1071 = vrot.slane %v1024, %v1070
      %vm1072 = vcmask 195712
      %v1073 = vsel %vm1072, %v1071, %v1066
      %v1074 = vadd.s32 %v1055, 4294967272
      %v1075 = vlaneseq
      %v1076 = vshrl.u32 %v1075, 7
      %v1077 = vsub.s32 %v1074, %v1076
      %v1078 = vrot.slane %v1025, %v1077
      %vm1079 = vcmask 261312
      %v1080 = vsel %vm1079, %v1078, %v1073
      %v1081 = vadd.s32 %v1055, 4294967264
      %v1082 = vlaneseq
      %v1083 = vshrl.u32 %v1082, 7
      %v1084 = vsub.s32 %v1081, %v1083
      %v1085 = vrot.slane %v1026, %v1084
      %vm1086 = vcmask 326912
      %v1087 = vsel %vm1086, %v1085, %v1080
      %v1088 = vadd.s32 %v1055, 4294967256
      %v1089 = vlaneseq
      %v1090 = vshrl.u32 %v1089, 7
      %v1091 = vsub.s32 %v1088, %v1090
      %v1092 = vrot.slane %v1027, %v1091
      %vm1093 = vcmask 392512
      %v1094 = vsel %vm1093, %v1092, %v1087
      %v1095 = vadd.s32 %v1055, 4294967248
      %v1096 = vlaneseq
      %v1097 = vshrl.u32 %v1096, 7
      %v1098 = vsub.s32 %v1095, %v1097
      %v1099 = vrot.slane %v1028, %v1098
      %vm1100 = vcmask 458112
      %v1101 = vsel %vm1100, %v1099, %v1094
      %v1102 = vadd.s32 %v1055, 4294967240
      %v1103 = vlaneseq
      %v1104 = vshrl.u32 %v1103, 7
      %v1105 = vsub.s32 %v1102, %v1104
      %v1106 = vrot.slane %v1029, %v1105
      %vm1107 = vcmask 523712
      %v1108 = vsel %vm1107, %v1106, %v1101
      %v1109 = vadd.s32 %v1055, 4294967232
      %v1110 = vlaneseq
      %v1111 = vshrl.u32 %v1110, 7
      %v1112 = vsub.s32 %v1109, %v1111
      %v1113 = vrot.slane %v1030, %v1112
      %vm1114 = vcmask 589312
      %v1115 = vsel %vm1114, %v1113, %v1108
      %v1116 = vadd.s32 %v1055, 4294967224
      %v1117 = vlaneseq
      %v1118 = vshrl.u32 %v1117, 7
      %v1119 = vsub.s32 %v1116, %v1118
      %v1120 = vrot.slane %v1031, %v1119
      %vm1121 = vcmask 654912
      %v1122 = vsel %vm1121, %v1120, %v1115
      %v1123 = vadd.s32 %v1055, 4294967216
      %v1124 = vlaneseq
      %v1125 = vshrl.u32 %v1124, 7
      %v1126 = vsub.s32 %v1123, %v1125
      %v1127 = vrot.slane %v1032, %v1126
      %vm1128 = vcmask 720512
      %v1129 = vsel %vm1128, %v1127, %v1122
      %v1130 = vadd.s32 %v1055, 4294967208
      %v1131 = vlaneseq
      %v1132 = vshrl.u32 %v1131, 7
      %v1133 = vsub.s32 %v1130, %v1132
      %v1134 = vrot.slane %v1033, %v1133
      %vm1135 = vcmask 786112
      %v1136 = vsel %vm1135, %v1134, %v1129
      %v1137 = vadd.s32 %v1055, 4294967200
      %v1138 = vlaneseq
      %v1139 = vshrl.u32 %v1138, 7
      %v1140 = vsub.s32 %v1137, %v1139
      %v1141 = vrot.slane %v1034, %v1140
      %vm1142 = vcmask 851712
      %v1143 = vsel %vm1142, %v1141, %v1136
      %v1144 = vadd.s32 %v1055, 4294967192
      %v1145 = vlaneseq
      %v1146 = vshrl.u32 %v1145, 7
      %v1147 = vsub.s32 %v1144, %v1146
      %v1148 = vrot.slane %v1035, %v1147
      %vm1149 = vcmask 917312
      %v1150 = vsel %vm1149, %v1148, %v1143
      %v1151 = vadd.s32 %v1055, 4294967184
      %v1152 = vlaneseq
      %v1153 = vshrl.u32 %v1152, 7
      %v1154 = vsub.s32 %v1151, %v1153
      %v1155 = vrot.slane %v1036, %v1154
      %vm1156 = vcmask 982912
      %v1157 = vsel %vm1156, %v1155, %v1150
      %v1158 = vadd.s32 %v1055, 4294967176
      %v1159 = vlaneseq
      %v1160 = vshrl.u32 %v1159, 7
      %v1161 = vsub.s32 %v1158, %v1160
      %v1162 = vrot.slane %v1037, %v1161
      %vm1163 = vcmask 1048512
      %v1164 = vsel %vm1163, %v1162, %v1157
      %1166 = vst [vmem:[#allocation11] sm:$0x1] %v1164
    $region45: #{tpu_custom_call.1} parent=1 // pred_fallthru
      _
    // Predicated region
    $region46: #{tpu_custom_call.1} parent=1 // pred_check
      _
    $region47: #{tpu_custom_call.1} parent=1 // pred_check_branch
      %1168 = sbr.rel (0) target = $region49
    $region48: #{tpu_custom_call.1} parent=1 // pred_region
      %s1170 = ssub.s32 16, 16
      %1171 = vsyncadd [#allocation7], %s1170
      %s1173 = sshll.u32 [#allocation11], 4
      %s1174 = int_to_ptr.vmem [resolvable:$true] %s1173
      %1176 = dma.vmem_to_hbm [thread:$0]  %s1174, 16, %s6, [#allocation7]
    $region49: #{tpu_custom_call.1} parent=1 // pred_fallthru
      _
    // Predicated region
    $region50: #{tpu_custom_call.1} parent=1 // pred_check
      _
    $region51: #{tpu_custom_call.1} parent=1 // pred_check_branch
      %1178 = sbr.rel (0) target = $region53
    $region52: #{tpu_custom_call.1} parent=1 // pred_region
      %1179 = dma.done [#allocation7], 16
    $region53: #{tpu_custom_call.1} parent=1 // pred_fallthru
      _
    %1180 = vsyncpa [#allocation6], 1
    %1181 = vsyncpa [#allocation9], 1
    %1182 = vsyncpa [#allocation7], 1

</llo_original>
